<compile_context>
chip_gen: v6e
topology: v6e:2x2x1
jax: 0.10.0
libtpu: 0.0.40
codegen_flags: <defaults>
</compile_context>

<pallas_src>
import jax
import jax.numpy as jnp
from jax import lax
from jax.experimental import pallas as pl
from jax.experimental.pallas import tpu as pltpu


def _round_up(x, m):
    return ((x + m - 1) // m) * m


def _rnn_kernel(x_ref, wih_ref, whh_ref, bias_ref, wfc_ref, bfc_ref,
                out_ref, xproj_ref, h_ref):
    # ---- hoisted input projection: one big MXU matmul for all timesteps ----
    # (T*B_pad, F_pad) @ (F_pad, H_pad) + fused (b_ih + b_hh)
    xproj_ref[...] = (
        jnp.dot(x_ref[...], wih_ref[...], preferred_element_type=jnp.float32)
        + bias_ref[...])

    h_ref[...] = jnp.zeros_like(h_ref)

    b_pad = h_ref.shape[0]
    n_steps = xproj_ref.shape[0] // b_pad

    # ---- serial recurrence: one (B_pad,H_pad)@(H_pad,H_pad) matmul + tanh ----
    def step(t, carry):
        start = pl.multiple_of(t * b_pad, b_pad)      # sublane-aligned slice
        x_t = xproj_ref[pl.ds(start, b_pad), :]
        h_ref[...] = jnp.tanh(
            x_t + jnp.dot(h_ref[...], whh_ref[...],
                          preferred_element_type=jnp.float32))
        return carry

    unroll = True if n_steps <= 32 else 8
    lax.fori_loop(0, n_steps, step, 0, unroll=unroll)

    # ---- FC head on the final hidden state (lane-dense 128-wide store) ----
    out_ref[...] = (
        jnp.dot(h_ref[...], wfc_ref[...], preferred_element_type=jnp.float32)
        + bfc_ref[...]).astype(out_ref.dtype)


def vanilla_rnn_forward(x, params, *, seq_length, feature_size, hidden_size,
                        num_classes=10):
    """Forward pass matching VanillaRNN.forward (PyTorch)."""
    w_ih, w_hh, b_ih, b_hh, w_fc, b_fc = params
    batch = x.shape[0]
    # mirror: x = x.view(batch, seq_length, feature_size)
    x = x.reshape(batch, seq_length, feature_size).astype(jnp.float32)

    B, T, F, H, C = batch, seq_length, feature_size, hidden_size, num_classes
    B_pad = _round_up(max(B, 8), 8)      # sublane multiple
    F_pad = _round_up(F, 128)            # lane multiples
    H_pad = _round_up(H, 128)
    C_pad = _round_up(C, 128)

    # (B, T, F) -> (T, B, F) -> zero-pad -> (T*B_pad, F_pad)
    x_tbf = jnp.transpose(x, (1, 0, 2))
    x_tbf = jnp.pad(x_tbf, ((0, 0), (0, B_pad - B), (0, F_pad - F)))
    x_flat = x_tbf.reshape(T * B_pad, F_pad)

    # Pre-transposed, zero-padded weights; RNN biases fused into one.
    wih_t = jnp.pad(w_ih.T.astype(jnp.float32), ((0, F_pad - F), (0, H_pad - H)))
    whh_t = jnp.pad(w_hh.T.astype(jnp.float32), ((0, H_pad - H), (0, H_pad - H)))
    bias = jnp.pad((b_ih + b_hh).astype(jnp.float32).reshape(1, H),
                   ((0, 0), (0, H_pad - H)))
    wfc_t = jnp.pad(w_fc.T.astype(jnp.float32), ((0, H_pad - H), (0, C_pad - C)))
    bfc = jnp.pad(b_fc.astype(jnp.float32).reshape(1, C),
                  ((0, 0), (0, C_pad - C)))

    grid_spec = pltpu.PrefetchScalarGridSpec(
        num_scalar_prefetch=0,
        grid=(1,),                        # whole sequence handled in-kernel
        in_specs=[
            pl.BlockSpec((T * B_pad, F_pad), lambda i: (0, 0)),   # x (flat)
            pl.BlockSpec((F_pad, H_pad), lambda i: (0, 0)),       # W_ih^T
            pl.BlockSpec((H_pad, H_pad), lambda i: (0, 0)),       # W_hh^T
            pl.BlockSpec((1, H_pad), lambda i: (0, 0)),           # b_ih+b_hh
            pl.BlockSpec((H_pad, C_pad), lambda i: (0, 0)),       # W_fc^T
            pl.BlockSpec((1, C_pad), lambda i: (0, 0)),           # b_fc
        ],
        out_specs=pl.BlockSpec((B_pad, C_pad), lambda i: (0, 0)),
        scratch_shapes=[
            pltpu.VMEM((T * B_pad, H_pad), jnp.float32),  # hoisted x-projection
            pltpu.VMEM((B_pad, H_pad), jnp.float32),      # hidden state
        ],
    )

    out_padded = pl.pallas_call(
        _rnn_kernel,
        out_shape=jax.ShapeDtypeStruct((B_pad, C_pad), jnp.float32),
        grid_spec=grid_spec,
        compiler_params=pltpu.CompilerParams(
            dimension_semantics=("arbitrary",)),
    )(x_flat, wih_t, whh_t, bias, wfc_t, bfc)

    # Strip the zero padding (batch rows / class lanes).
    return out_padded[:B, :C]


def init_params(key, feature_size, hidden_size, num_classes=10):
    """Deterministic PyTorch-style uniform(-1/sqrt(H), 1/sqrt(H)) init."""
    ks = jax.random.split(key, 6)
    bound = 1.0 / jnp.sqrt(hidden_size)
    w_ih = jax.random.uniform(ks[0], (hidden_size, feature_size),
                              minval=-bound, maxval=bound)
    w_hh = jax.random.uniform(ks[1], (hidden_size, hidden_size),
                              minval=-bound, maxval=bound)
    b_ih = jax.random.uniform(ks[2], (hidden_size,), minval=-bound, maxval=bound)
    b_hh = jax.random.uniform(ks[3], (hidden_size,), minval=-bound, maxval=bound)
    w_fc = jax.random.uniform(ks[4], (num_classes, hidden_size),
                              minval=-bound, maxval=bound)
    b_fc = jax.random.uniform(ks[5], (num_classes,), minval=-bound, maxval=bound)
    return tuple(p.astype(jnp.float32)
                 for p in (w_ih, w_hh, b_ih, b_hh, w_fc, b_fc))


def _reference_forward(x, params, seq_length, feature_size, hidden_size,
                       num_classes=10):
    w_ih, w_hh, b_ih, b_hh, w_fc, b_fc = params
    B = x.shape[0]
    xs = x.reshape(B, seq_length, feature_size).astype(jnp.float32)
    h = jnp.zeros((B, hidden_size), jnp.float32)
    for t in range(seq_length):
        h = jnp.tanh(xs[:, t, :] @ w_ih.T + b_ih + h @ w_hh.T + b_hh)
    return h @ w_fc.T + b_fc


if __name__ == "__main__":
    batch, seq_length, feature_size = 2, 8, 16
    hidden_size, num_classes = 32, 10

    key = jax.random.PRNGKey(0)
    kx, kp = jax.random.split(key)
    x = jax.random.normal(kx, (batch, seq_length, feature_size), jnp.float32)
    params = init_params(kp, feature_size, hidden_size, num_classes)

    out = vanilla_rnn_forward(x, params,
                              seq_length=seq_length,
                              feature_size=feature_size,
                              hidden_size=hidden_size,
                              num_classes=num_classes)
    out = jax.block_until_ready(out)

    ref = _reference_forward(x, params, seq_length, feature_size,
                             hidden_size, num_classes)
    assert out.shape == (batch, num_classes)
    assert jnp.allclose(out, ref, atol=1e-4, rtol=1e-4), "mismatch vs reference"

    print("KERNEL_OK")
</pallas_src>

<mosaic_0001>
module attributes {stable_mosaic.version = 11 : i64} {
  func.func @_rnn_kernel(%arg0: i32, %arg1: memref<64x128xf32, #tpu.memory_space<vmem>>, %arg2: memref<128x128xf32, #tpu.memory_space<vmem>>, %arg3: memref<128x128xf32, #tpu.memory_space<vmem>>, %arg4: memref<1x128xf32, #tpu.memory_space<vmem>>, %arg5: memref<128x128xf32, #tpu.memory_space<vmem>>, %arg6: memref<1x128xf32, #tpu.memory_space<vmem>>, %arg7: memref<8x128xf32, #tpu.memory_space<vmem>>, %arg8: memref<64x128xf32, #tpu.memory_space<vmem>>, %arg9: memref<8x128xf32, #tpu.memory_space<vmem>>) attributes {dimension_semantics = [#tpu.dimension_semantics<arbitrary>], iteration_bounds = array<i64: 1>, scalar_prefetch = 0 : i64, scratch_operands = 2 : i64, tpu.core_type = #tpu.core_type<tc>, window_params = [{pipeline_mode = #tpu.pipeline_mode<synchronous>, transform_indices = @transform_0, window_bounds = array<i64: 64, 128>}, {pipeline_mode = #tpu.pipeline_mode<synchronous>, transform_indices = @transform_1, window_bounds = array<i64: 128, 128>}, {pipeline_mode = #tpu.pipeline_mode<synchronous>, transform_indices = @transform_2, window_bounds = array<i64: 128, 128>}, {pipeline_mode = #tpu.pipeline_mode<synchronous>, transform_indices = @transform_3, window_bounds = array<i64: 1, 128>}, {pipeline_mode = #tpu.pipeline_mode<synchronous>, transform_indices = @transform_4, window_bounds = array<i64: 128, 128>}, {pipeline_mode = #tpu.pipeline_mode<synchronous>, transform_indices = @transform_5, window_bounds = array<i64: 1, 128>}, {pipeline_mode = #tpu.pipeline_mode<synchronous>, transform_indices = @transform_6, window_bounds = array<i64: 8, 128>}]} {
    %c0 = arith.constant 0 : index
    %c0_0 = arith.constant 0 : index
    %0 = vector.load %arg1[%c0, %c0_0] : memref<64x128xf32, #tpu.memory_space<vmem>>, vector<64x128xf32>
    %c0_1 = arith.constant 0 : index
    %c0_2 = arith.constant 0 : index
    %1 = vector.load %arg2[%c0_1, %c0_2] : memref<128x128xf32, #tpu.memory_space<vmem>>, vector<128x128xf32>
    %cst = arith.constant dense<0.000000e+00> : vector<64x128xf32>
    %2 = tpu.matmul %0, %1, %cst {dimension_numbers = #tpu.dot_dimension_numbers<[1], [0], [0], [1], [0, 0, 1, 1], [], []>} : vector<64x128xf32>, vector<128x128xf32>, vector<64x128xf32> -> vector<64x128xf32>
    %c0_3 = arith.constant 0 : index
    %c0_4 = arith.constant 0 : index
    %3 = vector.load %arg4[%c0_3, %c0_4] : memref<1x128xf32, #tpu.memory_space<vmem>>, vector<1x128xf32>
    %4 = vector.broadcast %3 : vector<1x128xf32> to vector<64x128xf32>
    %5 = arith.addf %2, %4 : vector<64x128xf32>
    %c0_5 = arith.constant 0 : index
    %c0_6 = arith.constant 0 : index
    %6 = vector.load %arg8[%c0_5, %c0_6] : memref<64x128xf32, #tpu.memory_space<vmem>>, vector<64x128xf32>
    tpu.vector_store %arg8[%c0_5, %c0_6], %5 {strides = array<i32>} : memref<64x128xf32, #tpu.memory_space<vmem>>, vector<64x128xf32>,
    %cst_7 = arith.constant 0.000000e+00 : f32
    %7 = vector.broadcast %cst_7 : f32 to vector<8x128xf32>
    %c0_8 = arith.constant 0 : index
    %c0_9 = arith.constant 0 : index
    %8 = vector.load %arg9[%c0_8, %c0_9] : memref<8x128xf32, #tpu.memory_space<vmem>>, vector<8x128xf32>
    tpu.vector_store %arg9[%c0_8, %c0_9], %7 {strides = array<i32>} : memref<8x128xf32, #tpu.memory_space<vmem>>, vector<8x128xf32>,
    %c0_i32 = arith.constant 0 : i32
    %c8_i32 = arith.constant 8 : i32
    %9 = arith.muli %c0_i32, %c8_i32 : i32
    %10 = tpu.assume_multiple %9, 8 : i32
    %11 = arith.index_cast %10 : i32 to index
    %c0_10 = arith.constant 0 : index
    %12 = vector.load %arg8[%11, %c0_10] : memref<64x128xf32, #tpu.memory_space<vmem>>, vector<8x128xf32>
    %c0_11 = arith.constant 0 : index
    %c0_12 = arith.constant 0 : index
    %13 = vector.load %arg9[%c0_11, %c0_12] : memref<8x128xf32, #tpu.memory_space<vmem>>, vector<8x128xf32>
    %c0_13 = arith.constant 0 : index
    %c0_14 = arith.constant 0 : index
    %14 = vector.load %arg3[%c0_13, %c0_14] : memref<128x128xf32, #tpu.memory_space<vmem>>, vector<128x128xf32>
    %cst_15 = arith.constant dense<0.000000e+00> : vector<8x128xf32>
    %15 = tpu.matmul %13, %14, %cst_15 {dimension_numbers = #tpu.dot_dimension_numbers<[1], [0], [0], [1], [0, 0, 1, 1], [], []>} : vector<8x128xf32>, vector<128x128xf32>, vector<8x128xf32> -> vector<8x128xf32>
    %16 = arith.addf %12, %15 : vector<8x128xf32>
    %17 = math.tanh %16 : vector<8x128xf32>
    %c0_16 = arith.constant 0 : index
    %c0_17 = arith.constant 0 : index
    %18 = vector.load %arg9[%c0_16, %c0_17] : memref<8x128xf32, #tpu.memory_space<vmem>>, vector<8x128xf32>
    tpu.vector_store %arg9[%c0_16, %c0_17], %17 {strides = array<i32>} : memref<8x128xf32, #tpu.memory_space<vmem>>, vector<8x128xf32>,
    %c1_i32 = arith.constant 1 : i32
    %c8_i32_18 = arith.constant 8 : i32
    %19 = arith.muli %c1_i32, %c8_i32_18 : i32
    %20 = tpu.assume_multiple %19, 8 : i32
    %21 = arith.index_cast %20 : i32 to index
    %c0_19 = arith.constant 0 : index
    %22 = vector.load %arg8[%21, %c0_19] : memref<64x128xf32, #tpu.memory_space<vmem>>, vector<8x128xf32>
    %c0_20 = arith.constant 0 : index
    %c0_21 = arith.constant 0 : index
    %23 = vector.load %arg9[%c0_20, %c0_21] : memref<8x128xf32, #tpu.memory_space<vmem>>, vector<8x128xf32>
    %c0_22 = arith.constant 0 : index
    %c0_23 = arith.constant 0 : index
    %24 = vector.load %arg3[%c0_22, %c0_23] : memref<128x128xf32, #tpu.memory_space<vmem>>, vector<128x128xf32>
    %cst_24 = arith.constant dense<0.000000e+00> : vector<8x128xf32>
    %25 = tpu.matmul %23, %24, %cst_24 {dimension_numbers = #tpu.dot_dimension_numbers<[1], [0], [0], [1], [0, 0, 1, 1], [], []>} : vector<8x128xf32>, vector<128x128xf32>, vector<8x128xf32> -> vector<8x128xf32>
    %26 = arith.addf %22, %25 : vector<8x128xf32>
    %27 = math.tanh %26 : vector<8x128xf32>
    %c0_25 = arith.constant 0 : index
    %c0_26 = arith.constant 0 : index
    %28 = vector.load %arg9[%c0_25, %c0_26] : memref<8x128xf32, #tpu.memory_space<vmem>>, vector<8x128xf32>
    tpu.vector_store %arg9[%c0_25, %c0_26], %27 {strides = array<i32>} : memref<8x128xf32, #tpu.memory_space<vmem>>, vector<8x128xf32>,
    %c2_i32 = arith.constant 2 : i32
    %c8_i32_27 = arith.constant 8 : i32
    %29 = arith.muli %c2_i32, %c8_i32_27 : i32
    %30 = tpu.assume_multiple %29, 8 : i32
    %31 = arith.index_cast %30 : i32 to index
    %c0_28 = arith.constant 0 : index
    %32 = vector.load %arg8[%31, %c0_28] : memref<64x128xf32, #tpu.memory_space<vmem>>, vector<8x128xf32>
    %c0_29 = arith.constant 0 : index
    %c0_30 = arith.constant 0 : index
    %33 = vector.load %arg9[%c0_29, %c0_30] : memref<8x128xf32, #tpu.memory_space<vmem>>, vector<8x128xf32>
    %c0_31 = arith.constant 0 : index
    %c0_32 = arith.constant 0 : index
    %34 = vector.load %arg3[%c0_31, %c0_32] : memref<128x128xf32, #tpu.memory_space<vmem>>, vector<128x128xf32>
    %cst_33 = arith.constant dense<0.000000e+00> : vector<8x128xf32>
    %35 = tpu.matmul %33, %34, %cst_33 {dimension_numbers = #tpu.dot_dimension_numbers<[1], [0], [0], [1], [0, 0, 1, 1], [], []>} : vector<8x128xf32>, vector<128x128xf32>, vector<8x128xf32> -> vector<8x128xf32>
    %36 = arith.addf %32, %35 : vector<8x128xf32>
    %37 = math.tanh %36 : vector<8x128xf32>
    %c0_34 = arith.constant 0 : index
    %c0_35 = arith.constant 0 : index
    %38 = vector.load %arg9[%c0_34, %c0_35] : memref<8x128xf32, #tpu.memory_space<vmem>>, vector<8x128xf32>
    tpu.vector_store %arg9[%c0_34, %c0_35], %37 {strides = array<i32>} : memref<8x128xf32, #tpu.memory_space<vmem>>, vector<8x128xf32>,
    %c3_i32 = arith.constant 3 : i32
    %c8_i32_36 = arith.constant 8 : i32
    %39 = arith.muli %c3_i32, %c8_i32_36 : i32
    %40 = tpu.assume_multiple %39, 8 : i32
    %41 = arith.index_cast %40 : i32 to index
    %c0_37 = arith.constant 0 : index
    %42 = vector.load %arg8[%41, %c0_37] : memref<64x128xf32, #tpu.memory_space<vmem>>, vector<8x128xf32>
    %c0_38 = arith.constant 0 : index
    %c0_39 = arith.constant 0 : index
    %43 = vector.load %arg9[%c0_38, %c0_39] : memref<8x128xf32, #tpu.memory_space<vmem>>, vector<8x128xf32>
    %c0_40 = arith.constant 0 : index
    %c0_41 = arith.constant 0 : index
    %44 = vector.load %arg3[%c0_40, %c0_41] : memref<128x128xf32, #tpu.memory_space<vmem>>, vector<128x128xf32>
    %cst_42 = arith.constant dense<0.000000e+00> : vector<8x128xf32>
    %45 = tpu.matmul %43, %44, %cst_42 {dimension_numbers = #tpu.dot_dimension_numbers<[1], [0], [0], [1], [0, 0, 1, 1], [], []>} : vector<8x128xf32>, vector<128x128xf32>, vector<8x128xf32> -> vector<8x128xf32>
    %46 = arith.addf %42, %45 : vector<8x128xf32>
    %47 = math.tanh %46 : vector<8x128xf32>
    %c0_43 = arith.constant 0 : index
    %c0_44 = arith.constant 0 : index
    %48 = vector.load %arg9[%c0_43, %c0_44] : memref<8x128xf32, #tpu.memory_space<vmem>>, vector<8x128xf32>
    tpu.vector_store %arg9[%c0_43, %c0_44], %47 {strides = array<i32>} : memref<8x128xf32, #tpu.memory_space<vmem>>, vector<8x128xf32>,
    %c4_i32 = arith.constant 4 : i32
    %c8_i32_45 = arith.constant 8 : i32
    %49 = arith.muli %c4_i32, %c8_i32_45 : i32
    %50 = tpu.assume_multiple %49, 8 : i32
    %51 = arith.index_cast %50 : i32 to index
    %c0_46 = arith.constant 0 : index
    %52 = vector.load %arg8[%51, %c0_46] : memref<64x128xf32, #tpu.memory_space<vmem>>, vector<8x128xf32>
    %c0_47 = arith.constant 0 : index
    %c0_48 = arith.constant 0 : index
    %53 = vector.load %arg9[%c0_47, %c0_48] : memref<8x128xf32, #tpu.memory_space<vmem>>, vector<8x128xf32>
    %c0_49 = arith.constant 0 : index
    %c0_50 = arith.constant 0 : index
    %54 = vector.load %arg3[%c0_49, %c0_50] : memref<128x128xf32, #tpu.memory_space<vmem>>, vector<128x128xf32>
    %cst_51 = arith.constant dense<0.000000e+00> : vector<8x128xf32>
    %55 = tpu.matmul %53, %54, %cst_51 {dimension_numbers = #tpu.dot_dimension_numbers<[1], [0], [0], [1], [0, 0, 1, 1], [], []>} : vector<8x128xf32>, vector<128x128xf32>, vector<8x128xf32> -> vector<8x128xf32>
    %56 = arith.addf %52, %55 : vector<8x128xf32>
    %57 = math.tanh %56 : vector<8x128xf32>
    %c0_52 = arith.constant 0 : index
    %c0_53 = arith.constant 0 : index
    %58 = vector.load %arg9[%c0_52, %c0_53] : memref<8x128xf32, #tpu.memory_space<vmem>>, vector<8x128xf32>
    tpu.vector_store %arg9[%c0_52, %c0_53], %57 {strides = array<i32>} : memref<8x128xf32, #tpu.memory_space<vmem>>, vector<8x128xf32>,
    %c5_i32 = arith.constant 5 : i32
    %c8_i32_54 = arith.constant 8 : i32
    %59 = arith.muli %c5_i32, %c8_i32_54 : i32
    %60 = tpu.assume_multiple %59, 8 : i32
    %61 = arith.index_cast %60 : i32 to index
    %c0_55 = arith.constant 0 : index
    %62 = vector.load %arg8[%61, %c0_55] : memref<64x128xf32, #tpu.memory_space<vmem>>, vector<8x128xf32>
    %c0_56 = arith.constant 0 : index
    %c0_57 = arith.constant 0 : index
    %63 = vector.load %arg9[%c0_56, %c0_57] : memref<8x128xf32, #tpu.memory_space<vmem>>, vector<8x128xf32>
    %c0_58 = arith.constant 0 : index
    %c0_59 = arith.constant 0 : index
    %64 = vector.load %arg3[%c0_58, %c0_59] : memref<128x128xf32, #tpu.memory_space<vmem>>, vector<128x128xf32>
    %cst_60 = arith.constant dense<0.000000e+00> : vector<8x128xf32>
    %65 = tpu.matmul %63, %64, %cst_60 {dimension_numbers = #tpu.dot_dimension_numbers<[1], [0], [0], [1], [0, 0, 1, 1], [], []>} : vector<8x128xf32>, vector<128x128xf32>, vector<8x128xf32> -> vector<8x128xf32>
    %66 = arith.addf %62, %65 : vector<8x128xf32>
    %67 = math.tanh %66 : vector<8x128xf32>
    %c0_61 = arith.constant 0 : index
    %c0_62 = arith.constant 0 : index
    %68 = vector.load %arg9[%c0_61, %c0_62] : memref<8x128xf32, #tpu.memory_space<vmem>>, vector<8x128xf32>
    tpu.vector_store %arg9[%c0_61, %c0_62], %67 {strides = array<i32>} : memref<8x128xf32, #tpu.memory_space<vmem>>, vector<8x128xf32>,
    %c6_i32 = arith.constant 6 : i32
    %c8_i32_63 = arith.constant 8 : i32
    %69 = arith.muli %c6_i32, %c8_i32_63 : i32
    %70 = tpu.assume_multiple %69, 8 : i32
    %71 = arith.index_cast %70 : i32 to index
    %c0_64 = arith.constant 0 : index
    %72 = vector.load %arg8[%71, %c0_64] : memref<64x128xf32, #tpu.memory_space<vmem>>, vector<8x128xf32>
    %c0_65 = arith.constant 0 : index
    %c0_66 = arith.constant 0 : index
    %73 = vector.load %arg9[%c0_65, %c0_66] : memref<8x128xf32, #tpu.memory_space<vmem>>, vector<8x128xf32>
    %c0_67 = arith.constant 0 : index
    %c0_68 = arith.constant 0 : index
    %74 = vector.load %arg3[%c0_67, %c0_68] : memref<128x128xf32, #tpu.memory_space<vmem>>, vector<128x128xf32>
    %cst_69 = arith.constant dense<0.000000e+00> : vector<8x128xf32>
    %75 = tpu.matmul %73, %74, %cst_69 {dimension_numbers = #tpu.dot_dimension_numbers<[1], [0], [0], [1], [0, 0, 1, 1], [], []>} : vector<8x128xf32>, vector<128x128xf32>, vector<8x128xf32> -> vector<8x128xf32>
    %76 = arith.addf %72, %75 : vector<8x128xf32>
    %77 = math.tanh %76 : vector<8x128xf32>
    %c0_70 = arith.constant 0 : index
    %c0_71 = arith.constant 0 : index
    %78 = vector.load %arg9[%c0_70, %c0_71] : memref<8x128xf32, #tpu.memory_space<vmem>>, vector<8x128xf32>
    tpu.vector_store %arg9[%c0_70, %c0_71], %77 {strides = array<i32>} : memref<8x128xf32, #tpu.memory_space<vmem>>, vector<8x128xf32>,
    %c7_i32 = arith.constant 7 : i32
    %c8_i32_72 = arith.constant 8 : i32
    %79 = arith.muli %c7_i32, %c8_i32_72 : i32
    %80 = tpu.assume_multiple %79, 8 : i32
    %81 = arith.index_cast %80 : i32 to index
    %c0_73 = arith.constant 0 : index
    %82 = vector.load %arg8[%81, %c0_73] : memref<64x128xf32, #tpu.memory_space<vmem>>, vector<8x128xf32>
    %c0_74 = arith.constant 0 : index
    %c0_75 = arith.constant 0 : index
    %83 = vector.load %arg9[%c0_74, %c0_75] : memref<8x128xf32, #tpu.memory_space<vmem>>, vector<8x128xf32>
    %c0_76 = arith.constant 0 : index
    %c0_77 = arith.constant 0 : index
    %84 = vector.load %arg3[%c0_76, %c0_77] : memref<128x128xf32, #tpu.memory_space<vmem>>, vector<128x128xf32>
    %cst_78 = arith.constant dense<0.000000e+00> : vector<8x128xf32>
    %85 = tpu.matmul %83, %84, %cst_78 {dimension_numbers = #tpu.dot_dimension_numbers<[1], [0], [0], [1], [0, 0, 1, 1], [], []>} : vector<8x128xf32>, vector<128x128xf32>, vector<8x128xf32> -> vector<8x128xf32>
    %86 = arith.addf %82, %85 : vector<8x128xf32>
    %87 = math.tanh %86 : vector<8x128xf32>
    %c0_79 = arith.constant 0 : index
    %c0_80 = arith.constant 0 : index
    %88 = vector.load %arg9[%c0_79, %c0_80] : memref<8x128xf32, #tpu.memory_space<vmem>>, vector<8x128xf32>
    tpu.vector_store %arg9[%c0_79, %c0_80], %87 {strides = array<i32>} : memref<8x128xf32, #tpu.memory_space<vmem>>, vector<8x128xf32>,
    %c8_i32_81 = arith.constant 8 : i32
    %c0_82 = arith.constant 0 : index
    %c0_83 = arith.constant 0 : index
    %89 = vector.load %arg9[%c0_82, %c0_83] : memref<8x128xf32, #tpu.memory_space<vmem>>, vector<8x128xf32>
    %c0_84 = arith.constant 0 : index
    %c0_85 = arith.constant 0 : index
    %90 = vector.load %arg5[%c0_84, %c0_85] : memref<128x128xf32, #tpu.memory_space<vmem>>, vector<128x128xf32>
    %cst_86 = arith.constant dense<0.000000e+00> : vector<8x128xf32>
    %91 = tpu.matmul %89, %90, %cst_86 {dimension_numbers = #tpu.dot_dimension_numbers<[1], [0], [0], [1], [0, 0, 1, 1], [], []>} : vector<8x128xf32>, vector<128x128xf32>, vector<8x128xf32> -> vector<8x128xf32>
    %c0_87 = arith.constant 0 : index
    %c0_88 = arith.constant 0 : index
    %92 = vector.load %arg6[%c0_87, %c0_88] : memref<1x128xf32, #tpu.memory_space<vmem>>, vector<1x128xf32>
    %93 = vector.broadcast %92 : vector<1x128xf32> to vector<8x128xf32>
    %94 = arith.addf %91, %93 : vector<8x128xf32>
    %c0_89 = arith.constant 0 : index
    %c0_90 = arith.constant 0 : index
    %95 = vector.load %arg7[%c0_89, %c0_90] : memref<8x128xf32, #tpu.memory_space<vmem>>, vector<8x128xf32>
    tpu.vector_store %arg7[%c0_89, %c0_90], %94 {strides = array<i32>} : memref<8x128xf32, #tpu.memory_space<vmem>>, vector<8x128xf32>,
    return
  }
  func.func @transform_0(%arg0: i32) -> (i32, i32) {
    %c0_i32 = arith.constant 0 : i32
    %c0_i32_0 = arith.constant 0 : i32
    %c0_i32_1 = arith.constant 0 : i32
    return %c0_i32, %c0_i32_0 : i32, i32
  }
  func.func @transform_1(%arg0: i32) -> (i32, i32) {
    %c0_i32 = arith.constant 0 : i32
    %c0_i32_0 = arith.constant 0 : i32
    %c0_i32_1 = arith.constant 0 : i32
    return %c0_i32, %c0_i32_0 : i32, i32
  }
  func.func @transform_2(%arg0: i32) -> (i32, i32) {
    %c0_i32 = arith.constant 0 : i32
    %c0_i32_0 = arith.constant 0 : i32
    %c0_i32_1 = arith.constant 0 : i32
    return %c0_i32, %c0_i32_0 : i32, i32
  }
  func.func @transform_3(%arg0: i32) -> (i32, i32) {
    %c0_i32 = arith.constant 0 : i32
    %c0_i32_0 = arith.constant 0 : i32
    %c0_i32_1 = arith.constant 0 : i32
    return %c0_i32, %c0_i32_0 : i32, i32
  }
  func.func @transform_4(%arg0: i32) -> (i32, i32) {
    %c0_i32 = arith.constant 0 : i32
    %c0_i32_0 = arith.constant 0 : i32
    %c0_i32_1 = arith.constant 0 : i32
    return %c0_i32, %c0_i32_0 : i32, i32
  }
  func.func @transform_5(%arg0: i32) -> (i32, i32) {
    %c0_i32 = arith.constant 0 : i32
    %c0_i32_0 = arith.constant 0 : i32
    %c0_i32_1 = arith.constant 0 : i32
    return %c0_i32, %c0_i32_0 : i32, i32
  }
  func.func @transform_6(%arg0: i32) -> (i32, i32) {
    %c0_i32 = arith.constant 0 : i32
    %c0_i32_0 = arith.constant 0 : i32
    %c0_i32_1 = arith.constant 0 : i32
    return %c0_i32, %c0_i32_0 : i32, i32
  }
}

</mosaic_0001>

<llo_original>
// kernel: tpu_custom_call.1
$region0: #{tpu_custom_call.1}
  #allocation0 [shape = 'u32[]', space=smem, size = 0x4, offset = 0x4, fixed_abs, tag = 'smem constant byte address 0x4 - core index']
  #allocation1 [shape = 'u32[144,128]{1,0:T(1,128)}', space=vmem, size = 0x12000, scoped, tag = 'internal scratch']
  #allocation2 [shape = 'f32[64,128]{1,0:T(8,128)}', space=vmem, size = 0x8000, scoped, tag = 'scratch operand']
  #allocation3 [shape = 'f32[8,128]{1,0:T(8,128)}', space=vmem, size = 0x1000, scoped, tag = 'scratch operand']
  %s0 = inlined_call_operand.hbm [shape: f32[64,128], index: 0, kind: input, shape index: {}]
  %s1 = inlined_call_operand.hbm [shape: f32[128,128], index: 1, kind: input, shape index: {}]
  %s2 = inlined_call_operand.hbm [shape: f32[128,128], index: 2, kind: input, shape index: {}]
  %s3 = inlined_call_operand.vmem [shape: f32[1,128], index: 3, kind: input, shape index: {}]
  %s4 = inlined_call_operand.hbm [shape: f32[128,128], index: 4, kind: input, shape index: {}]
  %s5 = inlined_call_operand.vmem [shape: f32[1,128], index: 5, kind: input, shape index: {}]
  %s6 = inlined_call_operand.hbm [shape: f32[8,128], index: 6, kind: output, shape index: {}]
  %s7 = sld [smem:[#allocation0]]
  $region50: #{tpu_custom_call.1} parent=0
    _
  %s9 = ssub.s32 1, %s7
  %s10 = scalar_select 0, %s9, %s7
  $region1: #{tpu_custom_call.1} parent=0
    #allocation4 [shape = 'u8[32768]{0}', space=vmem, size = 0x8000, scoped, tag = 'input window, operand 0, single buffered']
    #allocation5 [shape = 's32[1]{0}', space=sflag, size = 0x4, scoped, tag = 'scoped memory for tpu_custom_call.1']
    #allocation6 [shape = 's32[1]{0}', space=sflag, size = 0x4, scoped, tag = 'scoped memory for tpu_custom_call.1']
    #allocation7 [shape = 'u8[65536]{0}', space=vmem, size = 0x10000, scoped, tag = 'input window, operand 1, single buffered']
    #allocation8 [shape = 's32[1]{0}', space=sflag, size = 0x4, scoped, tag = 'scoped memory for tpu_custom_call.1']
    #allocation9 [shape = 'u8[65536]{0}', space=vmem, size = 0x10000, scoped, tag = 'input window, operand 2, single buffered']
    #allocation10 [shape = 'u8[65536]{0}', space=vmem, size = 0x10000, scoped, tag = 'input window, operand 4, single buffered']
    #allocation11 [shape = 's32[1]{0}', space=sflag, size = 0x4, scoped, tag = 'scoped memory for tpu_custom_call.1']
    #allocation12 [shape = 'u8[4096]{0}', space=vmem, size = 0x1000, scoped, tag = 'output window, operand 0, single buffered']
    %11 = vsyncpa [#allocation5], 0
    %12 = vsyncpa [#allocation8], 0
    %13 = vsyncpa [#allocation11], 0
    %14 = vsyncpa [#allocation6], 0
    // Predicated region
    $region2: #{tpu_custom_call.1} parent=1 // pred_check
      _
    $region3: #{tpu_custom_call.1} parent=1 // pred_check_branch
      %16 = sbr.rel (0) target = $region5
    $region4: #{tpu_custom_call.1} parent=1 // pred_region
      %s18 = ssub.s32 1024, 1024
      %19 = vsyncadd [#allocation5], %s18
      %s20 = sshll.u32 [#allocation4], 4
      %s21 = int_to_ptr.vmem [resolvable:$true] %s20
      %26 = dma.hbm_to_vmem [thread:$0]  %s0, 1024, %s21, [#allocation5], 128, 128, 8
    $region5: #{tpu_custom_call.1} parent=1 // pred_fallthru
      _
    // Predicated region
    $region6: #{tpu_custom_call.1} parent=1 // pred_check
      _
    $region7: #{tpu_custom_call.1} parent=1 // pred_check_branch
      %28 = sbr.rel (0) target = $region9
    $region8: #{tpu_custom_call.1} parent=1 // pred_region
      %s30 = ssub.s32 2048, 2048
      %31 = vsyncadd [#allocation8], %s30
      %s32 = sshll.u32 [#allocation7], 4
      %s33 = int_to_ptr.vmem [resolvable:$true] %s32
      %38 = dma.hbm_to_vmem [thread:$0]  %s1, 2048, %s33, [#allocation8], 128, 128, 8
    $region9: #{tpu_custom_call.1} parent=1 // pred_fallthru
      _
    // Predicated region
    $region10: #{tpu_custom_call.1} parent=1 // pred_check
      _
    $region11: #{tpu_custom_call.1} parent=1 // pred_check_branch
      %40 = sbr.rel (0) target = $region13
    $region12: #{tpu_custom_call.1} parent=1 // pred_region
      %s42 = ssub.s32 2048, 2048
      %43 = vsyncadd [#allocation8], %s42
      %s44 = sshll.u32 [#allocation9], 4
      %s45 = int_to_ptr.vmem [resolvable:$true] %s44
      %50 = dma.hbm_to_vmem [thread:$0]  %s2, 2048, %s45, [#allocation8], 128, 128, 8
    $region13: #{tpu_custom_call.1} parent=1 // pred_fallthru
      _
    // Predicated region
    $region14: #{tpu_custom_call.1} parent=1 // pred_check
      _
    $region15: #{tpu_custom_call.1} parent=1 // pred_check_branch
      %52 = sbr.rel (0) target = $region17
    $region16: #{tpu_custom_call.1} parent=1 // pred_region
      _
    $region17: #{tpu_custom_call.1} parent=1 // pred_fallthru
      _
    // Predicated region
    $region18: #{tpu_custom_call.1} parent=1 // pred_check
      _
    $region19: #{tpu_custom_call.1} parent=1 // pred_check_branch
      %54 = sbr.rel (0) target = $region21
    $region20: #{tpu_custom_call.1} parent=1 // pred_region
      %s56 = ssub.s32 2048, 2048
      %57 = vsyncadd [#allocation11], %s56
      %s58 = sshll.u32 [#allocation10], 4
      %s59 = int_to_ptr.vmem [resolvable:$true] %s58
      %64 = dma.hbm_to_vmem [thread:$0]  %s4, 2048, %s59, [#allocation11], 128, 128, 8
    $region21: #{tpu_custom_call.1} parent=1 // pred_fallthru
      _
    // Predicated region
    $region22: #{tpu_custom_call.1} parent=1 // pred_check
      _
    $region23: #{tpu_custom_call.1} parent=1 // pred_check_branch
      %66 = sbr.rel (0) target = $region25
    $region24: #{tpu_custom_call.1} parent=1 // pred_region
      _
    $region25: #{tpu_custom_call.1} parent=1 // pred_fallthru
      _
    // Predicated region
    $region26: #{tpu_custom_call.1} parent=1 // pred_check
      _
    $region27: #{tpu_custom_call.1} parent=1 // pred_check_branch
      %68 = sbr.rel (0) target = $region29
    $region28: #{tpu_custom_call.1} parent=1 // pred_region
      %69 = dma.done [#allocation5], 1024
    $region29: #{tpu_custom_call.1} parent=1 // pred_fallthru
      _
    // Predicated region
    $region30: #{tpu_custom_call.1} parent=1 // pred_check
      _
    $region31: #{tpu_custom_call.1} parent=1 // pred_check_branch
      %71 = sbr.rel (0) target = $region33
    $region32: #{tpu_custom_call.1} parent=1 // pred_region
      %72 = dma.done [#allocation8], 2048
    $region33: #{tpu_custom_call.1} parent=1 // pred_fallthru
      _
    // Predicated region
    $region34: #{tpu_custom_call.1} parent=1 // pred_check
      _
    $region35: #{tpu_custom_call.1} parent=1 // pred_check_branch
      %74 = sbr.rel (0) target = $region37
    $region36: #{tpu_custom_call.1} parent=1 // pred_region
      %75 = dma.done [#allocation8], 2048
    $region37: #{tpu_custom_call.1} parent=1 // pred_fallthru
      _
    // Predicated region
    $region38: #{tpu_custom_call.1} parent=1 // pred_check
      _
    $region39: #{tpu_custom_call.1} parent=1 // pred_check_branch
      %77 = sbr.rel (0) target = $region41
    $region40: #{tpu_custom_call.1} parent=1 // pred_region
      %78 = dma.done [#allocation11], 2048
    $region41: #{tpu_custom_call.1} parent=1 // pred_fallthru
      _
    %v79 = vld [vmem:[#allocation4] sm:$0xff]
    %v80 = vld [vmem:[#allocation4 + $0x8] sm:$0xff]
    %v81 = vld [vmem:[#allocation4 + $0x10] sm:$0xff]
    %v82 = vld [vmem:[#allocation4 + $0x18] sm:$0xff]
    %v83 = vld [vmem:[#allocation4 + $0x20] sm:$0xff]
    %v84 = vld [vmem:[#allocation4 + $0x28] sm:$0xff]
    %v85 = vld [vmem:[#allocation4 + $0x30] sm:$0xff]
    %v86 = vld [vmem:[#allocation4 + $0x38] sm:$0xff]
    %v87 = vld [vmem:[#allocation7] sm:$0xff]
    %v88 = vld [vmem:[#allocation7 + $0x8] sm:$0xff]
    %v89 = vld [vmem:[#allocation7 + $0x10] sm:$0xff]
    %v90 = vld [vmem:[#allocation7 + $0x18] sm:$0xff]
    %v91 = vld [vmem:[#allocation7 + $0x20] sm:$0xff]
    %v92 = vld [vmem:[#allocation7 + $0x28] sm:$0xff]
    %v93 = vld [vmem:[#allocation7 + $0x30] sm:$0xff]
    %v94 = vld [vmem:[#allocation7 + $0x38] sm:$0xff]
    %v95 = vld [vmem:[#allocation7 + $0x40] sm:$0xff]
    %v96 = vld [vmem:[#allocation7 + $0x48] sm:$0xff]
    %v97 = vld [vmem:[#allocation7 + $0x50] sm:$0xff]
    %v98 = vld [vmem:[#allocation7 + $0x58] sm:$0xff]
    %v99 = vld [vmem:[#allocation7 + $0x60] sm:$0xff]
    %v100 = vld [vmem:[#allocation7 + $0x68] sm:$0xff]
    %v101 = vld [vmem:[#allocation7 + $0x70] sm:$0xff]
    %v102 = vld [vmem:[#allocation7 + $0x78] sm:$0xff]
    %v103 = vld [vmem:[%s3] sm:$0x1]
    %v105 = vlaneseq
    %v106 = vshrl.u32 %v105, 7
    %v107 = vsub.s32 0, %v106
    %v108 = vrot.slane %v103, %v107
    %110 = vmatprep.subr.mxu0 0.0
    %111 = vmatpush1.msra.mxu0 %v102
    %112 = vmatprep.subr.mxu0 0.0
    %113 = vmatpush1.msra.mxu0 %v101
    %114 = vmatprep.subr.mxu0 0.0
    %115 = vmatpush1.msra.mxu0 %v100
    %116 = vmatprep.subr.mxu0 0.0
    %117 = vmatpush1.msra.mxu0 %v99
    %118 = vmatprep.subr.mxu0 0.0
    %119 = vmatpush1.msra.mxu0 %v98
    %120 = vmatprep.subr.mxu0 0.0
    %121 = vmatpush1.msra.mxu0 %v97
    %122 = vmatprep.subr.mxu0 0.0
    %123 = vmatpush1.msra.mxu0 %v96
    %124 = vmatprep.subr.mxu0 0.0
    %125 = vmatpush1.msra.mxu0 %v95
    %126 = vmatprep.subr.mxu0 0.0
    %127 = vmatpush1.msra.mxu0 %v94
    %128 = vmatprep.subr.mxu0 0.0
    %129 = vmatpush1.msra.mxu0 %v93
    %130 = vmatprep.subr.mxu0 0.0
    %131 = vmatpush1.msra.mxu0 %v92
    %132 = vmatprep.subr.mxu0 0.0
    %133 = vmatpush1.msra.mxu0 %v91
    %134 = vmatprep.subr.mxu0 0.0
    %135 = vmatpush1.msra.mxu0 %v90
    %136 = vmatprep.subr.mxu0 0.0
    %137 = vmatpush1.msra.mxu0 %v89
    %138 = vmatprep.subr.mxu0 0.0
    %139 = vmatpush1.msra.mxu0 %v88
    %140 = vmatprep.subr.mxu0 0.0
    %141 = vmatpush1.msra.mxu0 %v87
    %142 = vmatprep.subr.mxu0 0.0
    %143 = vmatpush2.msra.mxu0 0.0
    %144 = vmatprep.subr.mxu0 0.0
    %145 = vmatpush2.msra.mxu0 0.0
    %146 = vmatprep.subr.mxu0 0.0
    %147 = vmatpush2.msra.mxu0 0.0
    %148 = vmatprep.subr.mxu0 0.0
    %149 = vmatpush2.msra.mxu0 0.0
    %150 = vmatprep.subr.mxu0 0.0
    %151 = vmatpush2.msra.mxu0 0.0
    %152 = vmatprep.subr.mxu0 0.0
    %153 = vmatpush2.msra.mxu0 0.0
    %154 = vmatprep.subr.mxu0 0.0
    %155 = vmatpush2.msra.mxu0 0.0
    %156 = vmatprep.subr.mxu0 0.0
    %157 = vmatpush2.msra.mxu0 0.0
    %158 = vmatprep.subr.mxu0 0.0
    %159 = vmatpush2.msra.mxu0 0.0
    %160 = vmatprep.subr.mxu0 0.0
    %161 = vmatpush2.msra.mxu0 0.0
    %162 = vmatprep.subr.mxu0 0.0
    %163 = vmatpush2.msra.mxu0 0.0
    %164 = vmatprep.subr.mxu0 0.0
    %165 = vmatpush2.msra.mxu0 0.0
    %166 = vmatprep.subr.mxu0 0.0
    %167 = vmatpush2.msra.mxu0 0.0
    %168 = vmatprep.subr.mxu0 0.0
    %169 = vmatpush2.msra.mxu0 0.0
    %170 = vmatprep.subr.mxu0 0.0
    %171 = vmatpush2.msra.mxu0 0.0
    %172 = vmatprep.subr.mxu0 0.0
    %173 = vmatpush2.msra.mxu0 0.0
    %174 = vmatprep.mubr.f32.mxu0 0.0
    %175 = vmatmul.mubr.f32.gmra.mxu0 %v79
    %v176 = vpop.f32.mrf.mxu0
    %v177 = vadd.f32 %v108, %v176
    %v178 = vpop.f32.mrf.mxu0
    %179 = vmatprep.mubr.f32.mxu0 0.0
    %180 = vmatmul.mubr.f32.gmra.mxu0 %v80
    %v181 = vpop.f32.mrf.mxu0
    %v182 = vadd.f32 %v108, %v181
    %v183 = vpop.f32.mrf.mxu0
    %184 = vmatprep.mubr.f32.mxu0 0.0
    %185 = vmatmul.mubr.f32.gmra.mxu0 %v81
    %v186 = vpop.f32.mrf.mxu0
    %v187 = vadd.f32 %v108, %v186
    %v188 = vpop.f32.mrf.mxu0
    %189 = vmatprep.mubr.f32.mxu0 0.0
    %190 = vmatmul.mubr.f32.gmra.mxu0 %v82
    %v191 = vpop.f32.mrf.mxu0
    %v192 = vadd.f32 %v108, %v191
    %v193 = vpop.f32.mrf.mxu0
    %194 = vmatprep.mubr.f32.mxu0 0.0
    %195 = vmatmul.mubr.f32.gmra.mxu0 %v83
    %v196 = vpop.f32.mrf.mxu0
    %v197 = vadd.f32 %v108, %v196
    %v198 = vpop.f32.mrf.mxu0
    %199 = vmatprep.mubr.f32.mxu0 0.0
    %200 = vmatmul.mubr.f32.gmra.mxu0 %v84
    %v201 = vpop.f32.mrf.mxu0
    %v202 = vadd.f32 %v108, %v201
    %v203 = vpop.f32.mrf.mxu0
    %204 = vmatprep.mubr.f32.mxu0 0.0
    %205 = vmatmul.mubr.f32.gmra.mxu0 %v85
    %v206 = vpop.f32.mrf.mxu0
    %v207 = vadd.f32 %v108, %v206
    %v208 = vpop.f32.mrf.mxu0
    %209 = vmatprep.mubr.f32.mxu0 0.0
    %210 = vmatmul.mubr.f32.gmra.mxu0 %v86
    %v211 = vpop.f32.mrf.mxu0
    %v212 = vadd.f32 %v108, %v211
    %v213 = vpop.f32.mrf.mxu0
    %214 = vdwg.mxu0
    %215 = vst [vmem:[#allocation2] sm:$0xff] %v177
    %216 = vst [vmem:[#allocation2 + $0x8] sm:$0xff] %v182
    %217 = vst [vmem:[#allocation2 + $0x10] sm:$0xff] %v187
    %218 = vst [vmem:[#allocation2 + $0x18] sm:$0xff] %v192
    %219 = vst [vmem:[#allocation2 + $0x20] sm:$0xff] %v197
    %220 = vst [vmem:[#allocation2 + $0x28] sm:$0xff] %v202
    %221 = vst [vmem:[#allocation2 + $0x30] sm:$0xff] %v207
    %222 = vst [vmem:[#allocation2 + $0x38] sm:$0xff] %v212
    %223 = vst [vmem:[#allocation3] sm:$0xff] 0.0
    %v224 = vld [vmem:[#allocation2] sm:$0xff]
    %v225 = vld [vmem:[#allocation3] sm:$0xff]
    %v226 = vld [vmem:[#allocation9] sm:$0xff]
    %v227 = vld [vmem:[#allocation9 + $0x8] sm:$0xff]
    %v228 = vld [vmem:[#allocation9 + $0x10] sm:$0xff]
    %v229 = vld [vmem:[#allocation9 + $0x18] sm:$0xff]
    %v230 = vld [vmem:[#allocation9 + $0x20] sm:$0xff]
    %v231 = vld [vmem:[#allocation9 + $0x28] sm:$0xff]
    %v232 = vld [vmem:[#allocation9 + $0x30] sm:$0xff]
    %v233 = vld [vmem:[#allocation9 + $0x38] sm:$0xff]
    %v234 = vld [vmem:[#allocation9 + $0x40] sm:$0xff]
    %v235 = vld [vmem:[#allocation9 + $0x48] sm:$0xff]
    %v236 = vld [vmem:[#allocation9 + $0x50] sm:$0xff]
    %v237 = vld [vmem:[#allocation9 + $0x58] sm:$0xff]
    %v238 = vld [vmem:[#allocation9 + $0x60] sm:$0xff]
    %v239 = vld [vmem:[#allocation9 + $0x68] sm:$0xff]
    %v240 = vld [vmem:[#allocation9 + $0x70] sm:$0xff]
    %v241 = vld [vmem:[#allocation9 + $0x78] sm:$0xff]
    %242 = vmatprep.subr.mxu0 0.0
    %243 = vmatpush1.msra.mxu0 %v241
    %244 = vmatprep.subr.mxu0 0.0
    %245 = vmatpush1.msra.mxu0 %v240
    %246 = vmatprep.subr.mxu0 0.0
    %247 = vmatpush1.msra.mxu0 %v239
    %248 = vmatprep.subr.mxu0 0.0
    %249 = vmatpush1.msra.mxu0 %v238
    %250 = vmatprep.subr.mxu0 0.0
    %251 = vmatpush1.msra.mxu0 %v237
    %252 = vmatprep.subr.mxu0 0.0
    %253 = vmatpush1.msra.mxu0 %v236
    %254 = vmatprep.subr.mxu0 0.0
    %255 = vmatpush1.msra.mxu0 %v235
    %256 = vmatprep.subr.mxu0 0.0
    %257 = vmatpush1.msra.mxu0 %v234
    %258 = vmatprep.subr.mxu0 0.0
    %259 = vmatpush1.msra.mxu0 %v233
    %260 = vmatprep.subr.mxu0 0.0
    %261 = vmatpush1.msra.mxu0 %v232
    %262 = vmatprep.subr.mxu0 0.0
    %263 = vmatpush1.msra.mxu0 %v231
    %264 = vmatprep.subr.mxu0 0.0
    %265 = vmatpush1.msra.mxu0 %v230
    %266 = vmatprep.subr.mxu0 0.0
    %267 = vmatpush1.msra.mxu0 %v229
    %268 = vmatprep.subr.mxu0 0.0
    %269 = vmatpush1.msra.mxu0 %v228
    %270 = vmatprep.subr.mxu0 0.0
    %271 = vmatpush1.msra.mxu0 %v227
    %272 = vmatprep.subr.mxu0 0.0
    %273 = vmatpush1.msra.mxu0 %v226
    %274 = vmatprep.subr.mxu0 0.0
    %275 = vmatpush2.msra.mxu0 0.0
    %276 = vmatprep.subr.mxu0 0.0
    %277 = vmatpush2.msra.mxu0 0.0
    %278 = vmatprep.subr.mxu0 0.0
    %279 = vmatpush2.msra.mxu0 0.0
    %280 = vmatprep.subr.mxu0 0.0
    %281 = vmatpush2.msra.mxu0 0.0
    %282 = vmatprep.subr.mxu0 0.0
    %283 = vmatpush2.msra.mxu0 0.0
    %284 = vmatprep.subr.mxu0 0.0
    %285 = vmatpush2.msra.mxu0 0.0
    %286 = vmatprep.subr.mxu0 0.0
    %287 = vmatpush2.msra.mxu0 0.0
    %288 = vmatprep.subr.mxu0 0.0
    %289 = vmatpush2.msra.mxu0 0.0
    %290 = vmatprep.subr.mxu0 0.0
    %291 = vmatpush2.msra.mxu0 0.0
    %292 = vmatprep.subr.mxu0 0.0
    %293 = vmatpush2.msra.mxu0 0.0
    %294 = vmatprep.subr.mxu0 0.0
    %295 = vmatpush2.msra.mxu0 0.0
    %296 = vmatprep.subr.mxu0 0.0
    %297 = vmatpush2.msra.mxu0 0.0
    %298 = vmatprep.subr.mxu0 0.0
    %299 = vmatpush2.msra.mxu0 0.0
    %300 = vmatprep.subr.mxu0 0.0
    %301 = vmatpush2.msra.mxu0 0.0
    %302 = vmatprep.subr.mxu0 0.0
    %303 = vmatpush2.msra.mxu0 0.0
    %304 = vmatprep.subr.mxu0 0.0
    %305 = vmatpush2.msra.mxu0 0.0
    %306 = vmatprep.mubr.f32.mxu0 0.0
    %307 = vmatmul.mubr.f32.gmra.mxu0 %v225
    %v308 = vpop.f32.mrf.mxu0
    %v309 = vadd.f32 0.0, %v308
    %v310 = vpop.f32.mrf.mxu0
    %311 = vdwg.mxu0
    %v312 = vadd.f32 %v224, %v309
    %v313 = vtanh.pop %v312
    %314 = vst [vmem:[#allocation3] sm:$0xff] %v313
    %s315 = scalar_lea.vmem [#allocation2], 8
    %v316 = vld [vmem:[%s315] sm:$0xff]
    %v317 = vld [vmem:[#allocation3] sm:$0xff]
    %v318 = vld [vmem:[#allocation9] sm:$0xff]
    %v319 = vld [vmem:[#allocation9 + $0x8] sm:$0xff]
    %v320 = vld [vmem:[#allocation9 + $0x10] sm:$0xff]
    %v321 = vld [vmem:[#allocation9 + $0x18] sm:$0xff]
    %v322 = vld [vmem:[#allocation9 + $0x20] sm:$0xff]
    %v323 = vld [vmem:[#allocation9 + $0x28] sm:$0xff]
    %v324 = vld [vmem:[#allocation9 + $0x30] sm:$0xff]
    %v325 = vld [vmem:[#allocation9 + $0x38] sm:$0xff]
    %v326 = vld [vmem:[#allocation9 + $0x40] sm:$0xff]
    %v327 = vld [vmem:[#allocation9 + $0x48] sm:$0xff]
    %v328 = vld [vmem:[#allocation9 + $0x50] sm:$0xff]
    %v329 = vld [vmem:[#allocation9 + $0x58] sm:$0xff]
    %v330 = vld [vmem:[#allocation9 + $0x60] sm:$0xff]
    %v331 = vld [vmem:[#allocation9 + $0x68] sm:$0xff]
    %v332 = vld [vmem:[#allocation9 + $0x70] sm:$0xff]
    %v333 = vld [vmem:[#allocation9 + $0x78] sm:$0xff]
    %334 = vmatprep.subr.mxu0 0.0
    %335 = vmatpush1.msra.mxu0 %v333
    %336 = vmatprep.subr.mxu0 0.0
    %337 = vmatpush1.msra.mxu0 %v332
    %338 = vmatprep.subr.mxu0 0.0
    %339 = vmatpush1.msra.mxu0 %v331
    %340 = vmatprep.subr.mxu0 0.0
    %341 = vmatpush1.msra.mxu0 %v330
    %342 = vmatprep.subr.mxu0 0.0
    %343 = vmatpush1.msra.mxu0 %v329
    %344 = vmatprep.subr.mxu0 0.0
    %345 = vmatpush1.msra.mxu0 %v328
    %346 = vmatprep.subr.mxu0 0.0
    %347 = vmatpush1.msra.mxu0 %v327
    %348 = vmatprep.subr.mxu0 0.0
    %349 = vmatpush1.msra.mxu0 %v326
    %350 = vmatprep.subr.mxu0 0.0
    %351 = vmatpush1.msra.mxu0 %v325
    %352 = vmatprep.subr.mxu0 0.0
    %353 = vmatpush1.msra.mxu0 %v324
    %354 = vmatprep.subr.mxu0 0.0
    %355 = vmatpush1.msra.mxu0 %v323
    %356 = vmatprep.subr.mxu0 0.0
    %357 = vmatpush1.msra.mxu0 %v322
    %358 = vmatprep.subr.mxu0 0.0
    %359 = vmatpush1.msra.mxu0 %v321
    %360 = vmatprep.subr.mxu0 0.0
    %361 = vmatpush1.msra.mxu0 %v320
    %362 = vmatprep.subr.mxu0 0.0
    %363 = vmatpush1.msra.mxu0 %v319
    %364 = vmatprep.subr.mxu0 0.0
    %365 = vmatpush1.msra.mxu0 %v318
    %366 = vmatprep.subr.mxu0 0.0
    %367 = vmatpush2.msra.mxu0 0.0
    %368 = vmatprep.subr.mxu0 0.0
    %369 = vmatpush2.msra.mxu0 0.0
    %370 = vmatprep.subr.mxu0 0.0
    %371 = vmatpush2.msra.mxu0 0.0
    %372 = vmatprep.subr.mxu0 0.0
    %373 = vmatpush2.msra.mxu0 0.0
    %374 = vmatprep.subr.mxu0 0.0
    %375 = vmatpush2.msra.mxu0 0.0
    %376 = vmatprep.subr.mxu0 0.0
    %377 = vmatpush2.msra.mxu0 0.0
    %378 = vmatprep.subr.mxu0 0.0
    %379 = vmatpush2.msra.mxu0 0.0
    %380 = vmatprep.subr.mxu0 0.0
    %381 = vmatpush2.msra.mxu0 0.0
    %382 = vmatprep.subr.mxu0 0.0
    %383 = vmatpush2.msra.mxu0 0.0
    %384 = vmatprep.subr.mxu0 0.0
    %385 = vmatpush2.msra.mxu0 0.0
    %386 = vmatprep.subr.mxu0 0.0
    %387 = vmatpush2.msra.mxu0 0.0
    %388 = vmatprep.subr.mxu0 0.0
    %389 = vmatpush2.msra.mxu0 0.0
    %390 = vmatprep.subr.mxu0 0.0
    %391 = vmatpush2.msra.mxu0 0.0
    %392 = vmatprep.subr.mxu0 0.0
    %393 = vmatpush2.msra.mxu0 0.0
    %394 = vmatprep.subr.mxu0 0.0
    %395 = vmatpush2.msra.mxu0 0.0
    %396 = vmatprep.subr.mxu0 0.0
    %397 = vmatpush2.msra.mxu0 0.0
    %398 = vmatprep.mubr.f32.mxu0 0.0
    %399 = vmatmul.mubr.f32.gmra.mxu0 %v317
    %v400 = vpop.f32.mrf.mxu0
    %v401 = vadd.f32 0.0, %v400
    %v402 = vpop.f32.mrf.mxu0
    %403 = vdwg.mxu0
    %v404 = vadd.f32 %v316, %v401
    %v405 = vtanh.pop %v404
    %406 = vst [vmem:[#allocation3] sm:$0xff] %v405
    %s407 = scalar_lea.vmem [#allocation2], 16
    %v408 = vld [vmem:[%s407] sm:$0xff]
    %v409 = vld [vmem:[#allocation3] sm:$0xff]
    %v410 = vld [vmem:[#allocation9] sm:$0xff]
    %v411 = vld [vmem:[#allocation9 + $0x8] sm:$0xff]
    %v412 = vld [vmem:[#allocation9 + $0x10] sm:$0xff]
    %v413 = vld [vmem:[#allocation9 + $0x18] sm:$0xff]
    %v414 = vld [vmem:[#allocation9 + $0x20] sm:$0xff]
    %v415 = vld [vmem:[#allocation9 + $0x28] sm:$0xff]
    %v416 = vld [vmem:[#allocation9 + $0x30] sm:$0xff]
    %v417 = vld [vmem:[#allocation9 + $0x38] sm:$0xff]
    %v418 = vld [vmem:[#allocation9 + $0x40] sm:$0xff]
    %v419 = vld [vmem:[#allocation9 + $0x48] sm:$0xff]
    %v420 = vld [vmem:[#allocation9 + $0x50] sm:$0xff]
    %v421 = vld [vmem:[#allocation9 + $0x58] sm:$0xff]
    %v422 = vld [vmem:[#allocation9 + $0x60] sm:$0xff]
    %v423 = vld [vmem:[#allocation9 + $0x68] sm:$0xff]
    %v424 = vld [vmem:[#allocation9 + $0x70] sm:$0xff]
    %v425 = vld [vmem:[#allocation9 + $0x78] sm:$0xff]
    %426 = vmatprep.subr.mxu0 0.0
    %427 = vmatpush1.msra.mxu0 %v425
    %428 = vmatprep.subr.mxu0 0.0
    %429 = vmatpush1.msra.mxu0 %v424
    %430 = vmatprep.subr.mxu0 0.0
    %431 = vmatpush1.msra.mxu0 %v423
    %432 = vmatprep.subr.mxu0 0.0
    %433 = vmatpush1.msra.mxu0 %v422
    %434 = vmatprep.subr.mxu0 0.0
    %435 = vmatpush1.msra.mxu0 %v421
    %436 = vmatprep.subr.mxu0 0.0
    %437 = vmatpush1.msra.mxu0 %v420
    %438 = vmatprep.subr.mxu0 0.0
    %439 = vmatpush1.msra.mxu0 %v419
    %440 = vmatprep.subr.mxu0 0.0
    %441 = vmatpush1.msra.mxu0 %v418
    %442 = vmatprep.subr.mxu0 0.0
    %443 = vmatpush1.msra.mxu0 %v417
    %444 = vmatprep.subr.mxu0 0.0
    %445 = vmatpush1.msra.mxu0 %v416
    %446 = vmatprep.subr.mxu0 0.0
    %447 = vmatpush1.msra.mxu0 %v415
    %448 = vmatprep.subr.mxu0 0.0
    %449 = vmatpush1.msra.mxu0 %v414
    %450 = vmatprep.subr.mxu0 0.0
    %451 = vmatpush1.msra.mxu0 %v413
    %452 = vmatprep.subr.mxu0 0.0
    %453 = vmatpush1.msra.mxu0 %v412
    %454 = vmatprep.subr.mxu0 0.0
    %455 = vmatpush1.msra.mxu0 %v411
    %456 = vmatprep.subr.mxu0 0.0
    %457 = vmatpush1.msra.mxu0 %v410
    %458 = vmatprep.subr.mxu0 0.0
    %459 = vmatpush2.msra.mxu0 0.0
    %460 = vmatprep.subr.mxu0 0.0
    %461 = vmatpush2.msra.mxu0 0.0
    %462 = vmatprep.subr.mxu0 0.0
    %463 = vmatpush2.msra.mxu0 0.0
    %464 = vmatprep.subr.mxu0 0.0
    %465 = vmatpush2.msra.mxu0 0.0
    %466 = vmatprep.subr.mxu0 0.0
    %467 = vmatpush2.msra.mxu0 0.0
    %468 = vmatprep.subr.mxu0 0.0
    %469 = vmatpush2.msra.mxu0 0.0
    %470 = vmatprep.subr.mxu0 0.0
    %471 = vmatpush2.msra.mxu0 0.0
    %472 = vmatprep.subr.mxu0 0.0
    %473 = vmatpush2.msra.mxu0 0.0
    %474 = vmatprep.subr.mxu0 0.0
    %475 = vmatpush2.msra.mxu0 0.0
    %476 = vmatprep.subr.mxu0 0.0
    %477 = vmatpush2.msra.mxu0 0.0
    %478 = vmatprep.subr.mxu0 0.0
    %479 = vmatpush2.msra.mxu0 0.0
    %480 = vmatprep.subr.mxu0 0.0
    %481 = vmatpush2.msra.mxu0 0.0
    %482 = vmatprep.subr.mxu0 0.0
    %483 = vmatpush2.msra.mxu0 0.0
    %484 = vmatprep.subr.mxu0 0.0
    %485 = vmatpush2.msra.mxu0 0.0
    %486 = vmatprep.subr.mxu0 0.0
    %487 = vmatpush2.msra.mxu0 0.0
    %488 = vmatprep.subr.mxu0 0.0
    %489 = vmatpush2.msra.mxu0 0.0
    %490 = vmatprep.mubr.f32.mxu0 0.0
    %491 = vmatmul.mubr.f32.gmra.mxu0 %v409
    %v492 = vpop.f32.mrf.mxu0
    %v493 = vadd.f32 0.0, %v492
    %v494 = vpop.f32.mrf.mxu0
    %495 = vdwg.mxu0
    %v496 = vadd.f32 %v408, %v493
    %v497 = vtanh.pop %v496
    %498 = vst [vmem:[#allocation3] sm:$0xff] %v497
    %s499 = scalar_lea.vmem [#allocation2], 24
    %v500 = vld [vmem:[%s499] sm:$0xff]
    %v501 = vld [vmem:[#allocation3] sm:$0xff]
    %v502 = vld [vmem:[#allocation9] sm:$0xff]
    %v503 = vld [vmem:[#allocation9 + $0x8] sm:$0xff]
    %v504 = vld [vmem:[#allocation9 + $0x10] sm:$0xff]
    %v505 = vld [vmem:[#allocation9 + $0x18] sm:$0xff]
    %v506 = vld [vmem:[#allocation9 + $0x20] sm:$0xff]
    %v507 = vld [vmem:[#allocation9 + $0x28] sm:$0xff]
    %v508 = vld [vmem:[#allocation9 + $0x30] sm:$0xff]
    %v509 = vld [vmem:[#allocation9 + $0x38] sm:$0xff]
    %v510 = vld [vmem:[#allocation9 + $0x40] sm:$0xff]
    %v511 = vld [vmem:[#allocation9 + $0x48] sm:$0xff]
    %v512 = vld [vmem:[#allocation9 + $0x50] sm:$0xff]
    %v513 = vld [vmem:[#allocation9 + $0x58] sm:$0xff]
    %v514 = vld [vmem:[#allocation9 + $0x60] sm:$0xff]
    %v515 = vld [vmem:[#allocation9 + $0x68] sm:$0xff]
    %v516 = vld [vmem:[#allocation9 + $0x70] sm:$0xff]
    %v517 = vld [vmem:[#allocation9 + $0x78] sm:$0xff]
    %518 = vmatprep.subr.mxu0 0.0
    %519 = vmatpush1.msra.mxu0 %v517
    %520 = vmatprep.subr.mxu0 0.0
    %521 = vmatpush1.msra.mxu0 %v516
    %522 = vmatprep.subr.mxu0 0.0
    %523 = vmatpush1.msra.mxu0 %v515
    %524 = vmatprep.subr.mxu0 0.0
    %525 = vmatpush1.msra.mxu0 %v514
    %526 = vmatprep.subr.mxu0 0.0
    %527 = vmatpush1.msra.mxu0 %v513
    %528 = vmatprep.subr.mxu0 0.0
    %529 = vmatpush1.msra.mxu0 %v512
    %530 = vmatprep.subr.mxu0 0.0
    %531 = vmatpush1.msra.mxu0 %v511
    %532 = vmatprep.subr.mxu0 0.0
    %533 = vmatpush1.msra.mxu0 %v510
    %534 = vmatprep.subr.mxu0 0.0
    %535 = vmatpush1.msra.mxu0 %v509
    %536 = vmatprep.subr.mxu0 0.0
    %537 = vmatpush1.msra.mxu0 %v508
    %538 = vmatprep.subr.mxu0 0.0
    %539 = vmatpush1.msra.mxu0 %v507
    %540 = vmatprep.subr.mxu0 0.0
    %541 = vmatpush1.msra.mxu0 %v506
    %542 = vmatprep.subr.mxu0 0.0
    %543 = vmatpush1.msra.mxu0 %v505
    %544 = vmatprep.subr.mxu0 0.0
    %545 = vmatpush1.msra.mxu0 %v504
    %546 = vmatprep.subr.mxu0 0.0
    %547 = vmatpush1.msra.mxu0 %v503
    %548 = vmatprep.subr.mxu0 0.0
    %549 = vmatpush1.msra.mxu0 %v502
    %550 = vmatprep.subr.mxu0 0.0
    %551 = vmatpush2.msra.mxu0 0.0
    %552 = vmatprep.subr.mxu0 0.0
    %553 = vmatpush2.msra.mxu0 0.0
    %554 = vmatprep.subr.mxu0 0.0
    %555 = vmatpush2.msra.mxu0 0.0
    %556 = vmatprep.subr.mxu0 0.0
    %557 = vmatpush2.msra.mxu0 0.0
    %558 = vmatprep.subr.mxu0 0.0
    %559 = vmatpush2.msra.mxu0 0.0
    %560 = vmatprep.subr.mxu0 0.0
    %561 = vmatpush2.msra.mxu0 0.0
    %562 = vmatprep.subr.mxu0 0.0
    %563 = vmatpush2.msra.mxu0 0.0
    %564 = vmatprep.subr.mxu0 0.0
    %565 = vmatpush2.msra.mxu0 0.0
    %566 = vmatprep.subr.mxu0 0.0
    %567 = vmatpush2.msra.mxu0 0.0
    %568 = vmatprep.subr.mxu0 0.0
    %569 = vmatpush2.msra.mxu0 0.0
    %570 = vmatprep.subr.mxu0 0.0
    %571 = vmatpush2.msra.mxu0 0.0
    %572 = vmatprep.subr.mxu0 0.0
    %573 = vmatpush2.msra.mxu0 0.0
    %574 = vmatprep.subr.mxu0 0.0
    %575 = vmatpush2.msra.mxu0 0.0
    %576 = vmatprep.subr.mxu0 0.0
    %577 = vmatpush2.msra.mxu0 0.0
    %578 = vmatprep.subr.mxu0 0.0
    %579 = vmatpush2.msra.mxu0 0.0
    %580 = vmatprep.subr.mxu0 0.0
    %581 = vmatpush2.msra.mxu0 0.0
    %582 = vmatprep.mubr.f32.mxu0 0.0
    %583 = vmatmul.mubr.f32.gmra.mxu0 %v501
    %v584 = vpop.f32.mrf.mxu0
    %v585 = vadd.f32 0.0, %v584
    %v586 = vpop.f32.mrf.mxu0
    %587 = vdwg.mxu0
    %v588 = vadd.f32 %v500, %v585
    %v589 = vtanh.pop %v588
    %590 = vst [vmem:[#allocation3] sm:$0xff] %v589
    %s591 = scalar_lea.vmem [#allocation2], 32
    %v592 = vld [vmem:[%s591] sm:$0xff]
    %v593 = vld [vmem:[#allocation3] sm:$0xff]
    %v594 = vld [vmem:[#allocation9] sm:$0xff]
    %v595 = vld [vmem:[#allocation9 + $0x8] sm:$0xff]
    %v596 = vld [vmem:[#allocation9 + $0x10] sm:$0xff]
    %v597 = vld [vmem:[#allocation9 + $0x18] sm:$0xff]
    %v598 = vld [vmem:[#allocation9 + $0x20] sm:$0xff]
    %v599 = vld [vmem:[#allocation9 + $0x28] sm:$0xff]
    %v600 = vld [vmem:[#allocation9 + $0x30] sm:$0xff]
    %v601 = vld [vmem:[#allocation9 + $0x38] sm:$0xff]
    %v602 = vld [vmem:[#allocation9 + $0x40] sm:$0xff]
    %v603 = vld [vmem:[#allocation9 + $0x48] sm:$0xff]
    %v604 = vld [vmem:[#allocation9 + $0x50] sm:$0xff]
    %v605 = vld [vmem:[#allocation9 + $0x58] sm:$0xff]
    %v606 = vld [vmem:[#allocation9 + $0x60] sm:$0xff]
    %v607 = vld [vmem:[#allocation9 + $0x68] sm:$0xff]
    %v608 = vld [vmem:[#allocation9 + $0x70] sm:$0xff]
    %v609 = vld [vmem:[#allocation9 + $0x78] sm:$0xff]
    %610 = vmatprep.subr.mxu0 0.0
    %611 = vmatpush1.msra.mxu0 %v609
    %612 = vmatprep.subr.mxu0 0.0
    %613 = vmatpush1.msra.mxu0 %v608
    %614 = vmatprep.subr.mxu0 0.0
    %615 = vmatpush1.msra.mxu0 %v607
    %616 = vmatprep.subr.mxu0 0.0
    %617 = vmatpush1.msra.mxu0 %v606
    %618 = vmatprep.subr.mxu0 0.0
    %619 = vmatpush1.msra.mxu0 %v605
    %620 = vmatprep.subr.mxu0 0.0
    %621 = vmatpush1.msra.mxu0 %v604
    %622 = vmatprep.subr.mxu0 0.0
    %623 = vmatpush1.msra.mxu0 %v603
    %624 = vmatprep.subr.mxu0 0.0
    %625 = vmatpush1.msra.mxu0 %v602
    %626 = vmatprep.subr.mxu0 0.0
    %627 = vmatpush1.msra.mxu0 %v601
    %628 = vmatprep.subr.mxu0 0.0
    %629 = vmatpush1.msra.mxu0 %v600
    %630 = vmatprep.subr.mxu0 0.0
    %631 = vmatpush1.msra.mxu0 %v599
    %632 = vmatprep.subr.mxu0 0.0
    %633 = vmatpush1.msra.mxu0 %v598
    %634 = vmatprep.subr.mxu0 0.0
    %635 = vmatpush1.msra.mxu0 %v597
    %636 = vmatprep.subr.mxu0 0.0
    %637 = vmatpush1.msra.mxu0 %v596
    %638 = vmatprep.subr.mxu0 0.0
    %639 = vmatpush1.msra.mxu0 %v595
    %640 = vmatprep.subr.mxu0 0.0
    %641 = vmatpush1.msra.mxu0 %v594
    %642 = vmatprep.subr.mxu0 0.0
    %643 = vmatpush2.msra.mxu0 0.0
    %644 = vmatprep.subr.mxu0 0.0
    %645 = vmatpush2.msra.mxu0 0.0
    %646 = vmatprep.subr.mxu0 0.0
    %647 = vmatpush2.msra.mxu0 0.0
    %648 = vmatprep.subr.mxu0 0.0
    %649 = vmatpush2.msra.mxu0 0.0
    %650 = vmatprep.subr.mxu0 0.0
    %651 = vmatpush2.msra.mxu0 0.0
    %652 = vmatprep.subr.mxu0 0.0
    %653 = vmatpush2.msra.mxu0 0.0
    %654 = vmatprep.subr.mxu0 0.0
    %655 = vmatpush2.msra.mxu0 0.0
    %656 = vmatprep.subr.mxu0 0.0
    %657 = vmatpush2.msra.mxu0 0.0
    %658 = vmatprep.subr.mxu0 0.0
    %659 = vmatpush2.msra.mxu0 0.0
    %660 = vmatprep.subr.mxu0 0.0
    %661 = vmatpush2.msra.mxu0 0.0
    %662 = vmatprep.subr.mxu0 0.0
    %663 = vmatpush2.msra.mxu0 0.0
    %664 = vmatprep.subr.mxu0 0.0
    %665 = vmatpush2.msra.mxu0 0.0
    %666 = vmatprep.subr.mxu0 0.0
    %667 = vmatpush2.msra.mxu0 0.0
    %668 = vmatprep.subr.mxu0 0.0
    %669 = vmatpush2.msra.mxu0 0.0
    %670 = vmatprep.subr.mxu0 0.0
    %671 = vmatpush2.msra.mxu0 0.0
    %672 = vmatprep.subr.mxu0 0.0
    %673 = vmatpush2.msra.mxu0 0.0
    %674 = vmatprep.mubr.f32.mxu0 0.0
    %675 = vmatmul.mubr.f32.gmra.mxu0 %v593
    %v676 = vpop.f32.mrf.mxu0
    %v677 = vadd.f32 0.0, %v676
    %v678 = vpop.f32.mrf.mxu0
    %679 = vdwg.mxu0
    %v680 = vadd.f32 %v592, %v677
    %v681 = vtanh.pop %v680
    %682 = vst [vmem:[#allocation3] sm:$0xff] %v681
    %s683 = scalar_lea.vmem [#allocation2], 40
    %v684 = vld [vmem:[%s683] sm:$0xff]
    %v685 = vld [vmem:[#allocation3] sm:$0xff]
    %v686 = vld [vmem:[#allocation9] sm:$0xff]
    %v687 = vld [vmem:[#allocation9 + $0x8] sm:$0xff]
    %v688 = vld [vmem:[#allocation9 + $0x10] sm:$0xff]
    %v689 = vld [vmem:[#allocation9 + $0x18] sm:$0xff]
    %v690 = vld [vmem:[#allocation9 + $0x20] sm:$0xff]
    %v691 = vld [vmem:[#allocation9 + $0x28] sm:$0xff]
    %v692 = vld [vmem:[#allocation9 + $0x30] sm:$0xff]
    %v693 = vld [vmem:[#allocation9 + $0x38] sm:$0xff]
    %v694 = vld [vmem:[#allocation9 + $0x40] sm:$0xff]
    %v695 = vld [vmem:[#allocation9 + $0x48] sm:$0xff]
    %v696 = vld [vmem:[#allocation9 + $0x50] sm:$0xff]
    %v697 = vld [vmem:[#allocation9 + $0x58] sm:$0xff]
    %v698 = vld [vmem:[#allocation9 + $0x60] sm:$0xff]
    %v699 = vld [vmem:[#allocation9 + $0x68] sm:$0xff]
    %v700 = vld [vmem:[#allocation9 + $0x70] sm:$0xff]
    %v701 = vld [vmem:[#allocation9 + $0x78] sm:$0xff]
    %702 = vmatprep.subr.mxu0 0.0
    %703 = vmatpush1.msra.mxu0 %v701
    %704 = vmatprep.subr.mxu0 0.0
    %705 = vmatpush1.msra.mxu0 %v700
    %706 = vmatprep.subr.mxu0 0.0
    %707 = vmatpush1.msra.mxu0 %v699
    %708 = vmatprep.subr.mxu0 0.0
    %709 = vmatpush1.msra.mxu0 %v698
    %710 = vmatprep.subr.mxu0 0.0
    %711 = vmatpush1.msra.mxu0 %v697
    %712 = vmatprep.subr.mxu0 0.0
    %713 = vmatpush1.msra.mxu0 %v696
    %714 = vmatprep.subr.mxu0 0.0
    %715 = vmatpush1.msra.mxu0 %v695
    %716 = vmatprep.subr.mxu0 0.0
    %717 = vmatpush1.msra.mxu0 %v694
    %718 = vmatprep.subr.mxu0 0.0
    %719 = vmatpush1.msra.mxu0 %v693
    %720 = vmatprep.subr.mxu0 0.0
    %721 = vmatpush1.msra.mxu0 %v692
    %722 = vmatprep.subr.mxu0 0.0
    %723 = vmatpush1.msra.mxu0 %v691
    %724 = vmatprep.subr.mxu0 0.0
    %725 = vmatpush1.msra.mxu0 %v690
    %726 = vmatprep.subr.mxu0 0.0
    %727 = vmatpush1.msra.mxu0 %v689
    %728 = vmatprep.subr.mxu0 0.0
    %729 = vmatpush1.msra.mxu0 %v688
    %730 = vmatprep.subr.mxu0 0.0
    %731 = vmatpush1.msra.mxu0 %v687
    %732 = vmatprep.subr.mxu0 0.0
    %733 = vmatpush1.msra.mxu0 %v686
    %734 = vmatprep.subr.mxu0 0.0
    %735 = vmatpush2.msra.mxu0 0.0
    %736 = vmatprep.subr.mxu0 0.0
    %737 = vmatpush2.msra.mxu0 0.0
    %738 = vmatprep.subr.mxu0 0.0
    %739 = vmatpush2.msra.mxu0 0.0
    %740 = vmatprep.subr.mxu0 0.0
    %741 = vmatpush2.msra.mxu0 0.0
    %742 = vmatprep.subr.mxu0 0.0
    %743 = vmatpush2.msra.mxu0 0.0
    %744 = vmatprep.subr.mxu0 0.0
    %745 = vmatpush2.msra.mxu0 0.0
    %746 = vmatprep.subr.mxu0 0.0
    %747 = vmatpush2.msra.mxu0 0.0
    %748 = vmatprep.subr.mxu0 0.0
    %749 = vmatpush2.msra.mxu0 0.0
    %750 = vmatprep.subr.mxu0 0.0
    %751 = vmatpush2.msra.mxu0 0.0
    %752 = vmatprep.subr.mxu0 0.0
    %753 = vmatpush2.msra.mxu0 0.0
    %754 = vmatprep.subr.mxu0 0.0
    %755 = vmatpush2.msra.mxu0 0.0
    %756 = vmatprep.subr.mxu0 0.0
    %757 = vmatpush2.msra.mxu0 0.0
    %758 = vmatprep.subr.mxu0 0.0
    %759 = vmatpush2.msra.mxu0 0.0
    %760 = vmatprep.subr.mxu0 0.0
    %761 = vmatpush2.msra.mxu0 0.0
    %762 = vmatprep.subr.mxu0 0.0
    %763 = vmatpush2.msra.mxu0 0.0
    %764 = vmatprep.subr.mxu0 0.0
    %765 = vmatpush2.msra.mxu0 0.0
    %766 = vmatprep.mubr.f32.mxu0 0.0
    %767 = vmatmul.mubr.f32.gmra.mxu0 %v685
    %v768 = vpop.f32.mrf.mxu0
    %v769 = vadd.f32 0.0, %v768
    %v770 = vpop.f32.mrf.mxu0
    %771 = vdwg.mxu0
    %v772 = vadd.f32 %v684, %v769
    %v773 = vtanh.pop %v772
    %774 = vst [vmem:[#allocation3] sm:$0xff] %v773
    %s775 = scalar_lea.vmem [#allocation2], 48
    %v776 = vld [vmem:[%s775] sm:$0xff]
    %v777 = vld [vmem:[#allocation3] sm:$0xff]
    %v778 = vld [vmem:[#allocation9] sm:$0xff]
    %v779 = vld [vmem:[#allocation9 + $0x8] sm:$0xff]
    %v780 = vld [vmem:[#allocation9 + $0x10] sm:$0xff]
    %v781 = vld [vmem:[#allocation9 + $0x18] sm:$0xff]
    %v782 = vld [vmem:[#allocation9 + $0x20] sm:$0xff]
    %v783 = vld [vmem:[#allocation9 + $0x28] sm:$0xff]
    %v784 = vld [vmem:[#allocation9 + $0x30] sm:$0xff]
    %v785 = vld [vmem:[#allocation9 + $0x38] sm:$0xff]
    %v786 = vld [vmem:[#allocation9 + $0x40] sm:$0xff]
    %v787 = vld [vmem:[#allocation9 + $0x48] sm:$0xff]
    %v788 = vld [vmem:[#allocation9 + $0x50] sm:$0xff]
    %v789 = vld [vmem:[#allocation9 + $0x58] sm:$0xff]
    %v790 = vld [vmem:[#allocation9 + $0x60] sm:$0xff]
    %v791 = vld [vmem:[#allocation9 + $0x68] sm:$0xff]
    %v792 = vld [vmem:[#allocation9 + $0x70] sm:$0xff]
    %v793 = vld [vmem:[#allocation9 + $0x78] sm:$0xff]
    %794 = vmatprep.subr.mxu0 0.0
    %795 = vmatpush1.msra.mxu0 %v793
    %796 = vmatprep.subr.mxu0 0.0
    %797 = vmatpush1.msra.mxu0 %v792
    %798 = vmatprep.subr.mxu0 0.0
    %799 = vmatpush1.msra.mxu0 %v791
    %800 = vmatprep.subr.mxu0 0.0
    %801 = vmatpush1.msra.mxu0 %v790
    %802 = vmatprep.subr.mxu0 0.0
    %803 = vmatpush1.msra.mxu0 %v789
    %804 = vmatprep.subr.mxu0 0.0
    %805 = vmatpush1.msra.mxu0 %v788
    %806 = vmatprep.subr.mxu0 0.0
    %807 = vmatpush1.msra.mxu0 %v787
    %808 = vmatprep.subr.mxu0 0.0
    %809 = vmatpush1.msra.mxu0 %v786
    %810 = vmatprep.subr.mxu0 0.0
    %811 = vmatpush1.msra.mxu0 %v785
    %812 = vmatprep.subr.mxu0 0.0
    %813 = vmatpush1.msra.mxu0 %v784
    %814 = vmatprep.subr.mxu0 0.0
    %815 = vmatpush1.msra.mxu0 %v783
    %816 = vmatprep.subr.mxu0 0.0
    %817 = vmatpush1.msra.mxu0 %v782
    %818 = vmatprep.subr.mxu0 0.0
    %819 = vmatpush1.msra.mxu0 %v781
    %820 = vmatprep.subr.mxu0 0.0
    %821 = vmatpush1.msra.mxu0 %v780
    %822 = vmatprep.subr.mxu0 0.0
    %823 = vmatpush1.msra.mxu0 %v779
    %824 = vmatprep.subr.mxu0 0.0
    %825 = vmatpush1.msra.mxu0 %v778
    %826 = vmatprep.subr.mxu0 0.0
    %827 = vmatpush2.msra.mxu0 0.0
    %828 = vmatprep.subr.mxu0 0.0
    %829 = vmatpush2.msra.mxu0 0.0
    %830 = vmatprep.subr.mxu0 0.0
    %831 = vmatpush2.msra.mxu0 0.0
    %832 = vmatprep.subr.mxu0 0.0
    %833 = vmatpush2.msra.mxu0 0.0
    %834 = vmatprep.subr.mxu0 0.0
    %835 = vmatpush2.msra.mxu0 0.0
    %836 = vmatprep.subr.mxu0 0.0
    %837 = vmatpush2.msra.mxu0 0.0
    %838 = vmatprep.subr.mxu0 0.0
    %839 = vmatpush2.msra.mxu0 0.0
    %840 = vmatprep.subr.mxu0 0.0
    %841 = vmatpush2.msra.mxu0 0.0
    %842 = vmatprep.subr.mxu0 0.0
    %843 = vmatpush2.msra.mxu0 0.0
    %844 = vmatprep.subr.mxu0 0.0
    %845 = vmatpush2.msra.mxu0 0.0
    %846 = vmatprep.subr.mxu0 0.0
    %847 = vmatpush2.msra.mxu0 0.0
    %848 = vmatprep.subr.mxu0 0.0
    %849 = vmatpush2.msra.mxu0 0.0
    %850 = vmatprep.subr.mxu0 0.0
    %851 = vmatpush2.msra.mxu0 0.0
    %852 = vmatprep.subr.mxu0 0.0
    %853 = vmatpush2.msra.mxu0 0.0
    %854 = vmatprep.subr.mxu0 0.0
    %855 = vmatpush2.msra.mxu0 0.0
    %856 = vmatprep.subr.mxu0 0.0
    %857 = vmatpush2.msra.mxu0 0.0
    %858 = vmatprep.mubr.f32.mxu0 0.0
    %859 = vmatmul.mubr.f32.gmra.mxu0 %v777
    %v860 = vpop.f32.mrf.mxu0
    %v861 = vadd.f32 0.0, %v860
    %v862 = vpop.f32.mrf.mxu0
    %863 = vdwg.mxu0
    %v864 = vadd.f32 %v776, %v861
    %v865 = vtanh.pop %v864
    %866 = vst [vmem:[#allocation3] sm:$0xff] %v865
    %s867 = scalar_lea.vmem [#allocation2], 56
    %v868 = vld [vmem:[%s867] sm:$0xff]
    %v869 = vld [vmem:[#allocation3] sm:$0xff]
    %v870 = vld [vmem:[#allocation9] sm:$0xff]
    %v871 = vld [vmem:[#allocation9 + $0x8] sm:$0xff]
    %v872 = vld [vmem:[#allocation9 + $0x10] sm:$0xff]
    %v873 = vld [vmem:[#allocation9 + $0x18] sm:$0xff]
    %v874 = vld [vmem:[#allocation9 + $0x20] sm:$0xff]
    %v875 = vld [vmem:[#allocation9 + $0x28] sm:$0xff]
    %v876 = vld [vmem:[#allocation9 + $0x30] sm:$0xff]
    %v877 = vld [vmem:[#allocation9 + $0x38] sm:$0xff]
    %v878 = vld [vmem:[#allocation9 + $0x40] sm:$0xff]
    %v879 = vld [vmem:[#allocation9 + $0x48] sm:$0xff]
    %v880 = vld [vmem:[#allocation9 + $0x50] sm:$0xff]
    %v881 = vld [vmem:[#allocation9 + $0x58] sm:$0xff]
    %v882 = vld [vmem:[#allocation9 + $0x60] sm:$0xff]
    %v883 = vld [vmem:[#allocation9 + $0x68] sm:$0xff]
    %v884 = vld [vmem:[#allocation9 + $0x70] sm:$0xff]
    %v885 = vld [vmem:[#allocation9 + $0x78] sm:$0xff]
    %886 = vmatprep.subr.mxu0 0.0
    %887 = vmatpush1.msra.mxu0 %v885
    %888 = vmatprep.subr.mxu0 0.0
    %889 = vmatpush1.msra.mxu0 %v884
    %890 = vmatprep.subr.mxu0 0.0
    %891 = vmatpush1.msra.mxu0 %v883
    %892 = vmatprep.subr.mxu0 0.0
    %893 = vmatpush1.msra.mxu0 %v882
    %894 = vmatprep.subr.mxu0 0.0
    %895 = vmatpush1.msra.mxu0 %v881
    %896 = vmatprep.subr.mxu0 0.0
    %897 = vmatpush1.msra.mxu0 %v880
    %898 = vmatprep.subr.mxu0 0.0
    %899 = vmatpush1.msra.mxu0 %v879
    %900 = vmatprep.subr.mxu0 0.0
    %901 = vmatpush1.msra.mxu0 %v878
    %902 = vmatprep.subr.mxu0 0.0
    %903 = vmatpush1.msra.mxu0 %v877
    %904 = vmatprep.subr.mxu0 0.0
    %905 = vmatpush1.msra.mxu0 %v876
    %906 = vmatprep.subr.mxu0 0.0
    %907 = vmatpush1.msra.mxu0 %v875
    %908 = vmatprep.subr.mxu0 0.0
    %909 = vmatpush1.msra.mxu0 %v874
    %910 = vmatprep.subr.mxu0 0.0
    %911 = vmatpush1.msra.mxu0 %v873
    %912 = vmatprep.subr.mxu0 0.0
    %913 = vmatpush1.msra.mxu0 %v872
    %914 = vmatprep.subr.mxu0 0.0
    %915 = vmatpush1.msra.mxu0 %v871
    %916 = vmatprep.subr.mxu0 0.0
    %917 = vmatpush1.msra.mxu0 %v870
    %918 = vmatprep.subr.mxu0 0.0
    %919 = vmatpush2.msra.mxu0 0.0
    %920 = vmatprep.subr.mxu0 0.0
    %921 = vmatpush2.msra.mxu0 0.0
    %922 = vmatprep.subr.mxu0 0.0
    %923 = vmatpush2.msra.mxu0 0.0
    %924 = vmatprep.subr.mxu0 0.0
    %925 = vmatpush2.msra.mxu0 0.0
    %926 = vmatprep.subr.mxu0 0.0
    %927 = vmatpush2.msra.mxu0 0.0
    %928 = vmatprep.subr.mxu0 0.0
    %929 = vmatpush2.msra.mxu0 0.0
    %930 = vmatprep.subr.mxu0 0.0
    %931 = vmatpush2.msra.mxu0 0.0
    %932 = vmatprep.subr.mxu0 0.0
    %933 = vmatpush2.msra.mxu0 0.0
    %934 = vmatprep.subr.mxu0 0.0
    %935 = vmatpush2.msra.mxu0 0.0
    %936 = vmatprep.subr.mxu0 0.0
    %937 = vmatpush2.msra.mxu0 0.0
    %938 = vmatprep.subr.mxu0 0.0
    %939 = vmatpush2.msra.mxu0 0.0
    %940 = vmatprep.subr.mxu0 0.0
    %941 = vmatpush2.msra.mxu0 0.0
    %942 = vmatprep.subr.mxu0 0.0
    %943 = vmatpush2.msra.mxu0 0.0
    %944 = vmatprep.subr.mxu0 0.0
    %945 = vmatpush2.msra.mxu0 0.0
    %946 = vmatprep.subr.mxu0 0.0
    %947 = vmatpush2.msra.mxu0 0.0
    %948 = vmatprep.subr.mxu0 0.0
    %949 = vmatpush2.msra.mxu0 0.0
    %950 = vmatprep.mubr.f32.mxu0 0.0
    %951 = vmatmul.mubr.f32.gmra.mxu0 %v869
    %v952 = vpop.f32.mrf.mxu0
    %v953 = vadd.f32 0.0, %v952
    %v954 = vpop.f32.mrf.mxu0
    %955 = vdwg.mxu0
    %v956 = vadd.f32 %v868, %v953
    %v957 = vtanh.pop %v956
    %958 = vst [vmem:[#allocation3] sm:$0xff] %v957
    %v959 = vld [vmem:[#allocation3] sm:$0xff]
    %v960 = vld [vmem:[#allocation10] sm:$0xff]
    %v961 = vld [vmem:[#allocation10 + $0x8] sm:$0xff]
    %v962 = vld [vmem:[#allocation10 + $0x10] sm:$0xff]
    %v963 = vld [vmem:[#allocation10 + $0x18] sm:$0xff]
    %v964 = vld [vmem:[#allocation10 + $0x20] sm:$0xff]
    %v965 = vld [vmem:[#allocation10 + $0x28] sm:$0xff]
    %v966 = vld [vmem:[#allocation10 + $0x30] sm:$0xff]
    %v967 = vld [vmem:[#allocation10 + $0x38] sm:$0xff]
    %v968 = vld [vmem:[#allocation10 + $0x40] sm:$0xff]
    %v969 = vld [vmem:[#allocation10 + $0x48] sm:$0xff]
    %v970 = vld [vmem:[#allocation10 + $0x50] sm:$0xff]
    %v971 = vld [vmem:[#allocation10 + $0x58] sm:$0xff]
    %v972 = vld [vmem:[#allocation10 + $0x60] sm:$0xff]
    %v973 = vld [vmem:[#allocation10 + $0x68] sm:$0xff]
    %v974 = vld [vmem:[#allocation10 + $0x70] sm:$0xff]
    %v975 = vld [vmem:[#allocation10 + $0x78] sm:$0xff]
    %v976 = vld [vmem:[%s5] sm:$0x1]
    %v978 = vlaneseq
    %v979 = vshrl.u32 %v978, 7
    %v980 = vsub.s32 0, %v979
    %v981 = vrot.slane %v976, %v980
    %983 = vmatprep.subr.mxu0 0.0
    %984 = vmatpush1.msra.mxu0 %v975
    %985 = vmatprep.subr.mxu0 0.0
    %986 = vmatpush1.msra.mxu0 %v974
    %987 = vmatprep.subr.mxu0 0.0
    %988 = vmatpush1.msra.mxu0 %v973
    %989 = vmatprep.subr.mxu0 0.0
    %990 = vmatpush1.msra.mxu0 %v972
    %991 = vmatprep.subr.mxu0 0.0
    %992 = vmatpush1.msra.mxu0 %v971
    %993 = vmatprep.subr.mxu0 0.0
    %994 = vmatpush1.msra.mxu0 %v970
    %995 = vmatprep.subr.mxu0 0.0
    %996 = vmatpush1.msra.mxu0 %v969
    %997 = vmatprep.subr.mxu0 0.0
    %998 = vmatpush1.msra.mxu0 %v968
    %999 = vmatprep.subr.mxu0 0.0
    %1000 = vmatpush1.msra.mxu0 %v967
    %1001 = vmatprep.subr.mxu0 0.0
    %1002 = vmatpush1.msra.mxu0 %v966
    %1003 = vmatprep.subr.mxu0 0.0
    %1004 = vmatpush1.msra.mxu0 %v965
    %1005 = vmatprep.subr.mxu0 0.0
    %1006 = vmatpush1.msra.mxu0 %v964
    %1007 = vmatprep.subr.mxu0 0.0
    %1008 = vmatpush1.msra.mxu0 %v963
    %1009 = vmatprep.subr.mxu0 0.0
    %1010 = vmatpush1.msra.mxu0 %v962
    %1011 = vmatprep.subr.mxu0 0.0
    %1012 = vmatpush1.msra.mxu0 %v961
    %1013 = vmatprep.subr.mxu0 0.0
    %1014 = vmatpush1.msra.mxu0 %v960
    %1015 = vmatprep.subr.mxu0 0.0
    %1016 = vmatpush2.msra.mxu0 0.0
    %1017 = vmatprep.subr.mxu0 0.0
    %1018 = vmatpush2.msra.mxu0 0.0
    %1019 = vmatprep.subr.mxu0 0.0
    %1020 = vmatpush2.msra.mxu0 0.0
    %1021 = vmatprep.subr.mxu0 0.0
    %1022 = vmatpush2.msra.mxu0 0.0
    %1023 = vmatprep.subr.mxu0 0.0
    %1024 = vmatpush2.msra.mxu0 0.0
    %1025 = vmatprep.subr.mxu0 0.0
    %1026 = vmatpush2.msra.mxu0 0.0
    %1027 = vmatprep.subr.mxu0 0.0
    %1028 = vmatpush2.msra.mxu0 0.0
    %1029 = vmatprep.subr.mxu0 0.0
    %1030 = vmatpush2.msra.mxu0 0.0
    %1031 = vmatprep.subr.mxu0 0.0
    %1032 = vmatpush2.msra.mxu0 0.0
    %1033 = vmatprep.subr.mxu0 0.0
    %1034 = vmatpush2.msra.mxu0 0.0
    %1035 = vmatprep.subr.mxu0 0.0
    %1036 = vmatpush2.msra.mxu0 0.0
    %1037 = vmatprep.subr.mxu0 0.0
    %1038 = vmatpush2.msra.mxu0 0.0
    %1039 = vmatprep.subr.mxu0 0.0
    %1040 = vmatpush2.msra.mxu0 0.0
    %1041 = vmatprep.subr.mxu0 0.0
    %1042 = vmatpush2.msra.mxu0 0.0
    %1043 = vmatprep.subr.mxu0 0.0
    %1044 = vmatpush2.msra.mxu0 0.0
    %1045 = vmatprep.subr.mxu0 0.0
    %1046 = vmatpush2.msra.mxu0 0.0
    %1047 = vmatprep.mubr.f32.mxu0 0.0
    %1048 = vmatmul.mubr.f32.gmra.mxu0 %v959
    %v1049 = vpop.f32.mrf.mxu0
    %v1050 = vadd.f32 %v981, %v1049
    %v1051 = vpop.f32.mrf.mxu0
    %1052 = vdwg.mxu0
    %1053 = vst [vmem:[#allocation12] sm:$0xff] %v1050
    // Predicated region
    $region42: #{tpu_custom_call.1} parent=1 // pred_check
      _
    $region43: #{tpu_custom_call.1} parent=1 // pred_check_branch
      %1055 = sbr.rel (0) target = $region45
    $region44: #{tpu_custom_call.1} parent=1 // pred_region
      %s1057 = ssub.s32 128, 128
      %1058 = vsyncadd [#allocation6], %s1057
      %s1060 = sshll.u32 [#allocation12], 4
      %s1061 = int_to_ptr.vmem [resolvable:$true] %s1060
      %1063 = dma.vmem_to_hbm [thread:$0]  %s1061, 128, %s6, [#allocation6]
    $region45: #{tpu_custom_call.1} parent=1 // pred_fallthru
      _
    // Predicated region
    $region46: #{tpu_custom_call.1} parent=1 // pred_check
      _
    $region47: #{tpu_custom_call.1} parent=1 // pred_check_branch
      %1065 = sbr.rel (0) target = $region49
    $region48: #{tpu_custom_call.1} parent=1 // pred_region
      %1066 = dma.done [#allocation6], 128
    $region49: #{tpu_custom_call.1} parent=1 // pred_fallthru
      _
    %1067 = vsyncpa [#allocation5], 1
    %1068 = vsyncpa [#allocation8], 1
    %1069 = vsyncpa [#allocation11], 1
    %1070 = vsyncpa [#allocation6], 1

</llo_original>
